<compile_context>
chip_gen: v7x
topology: tpu7x:2x2x1
jax: 0.10.0
libtpu: 0.0.40
codegen_flags: <defaults>
</compile_context>

<pallas_src>
import functools

import jax
import jax.numpy as jnp
from jax import lax
from jax.experimental import pallas as pl
from jax.experimental.pallas import tpu as pltpu


# ----------------------------------------------------------------------------
# Generation-dependent tuning (VMEM budget / buffering depth)
# ----------------------------------------------------------------------------
def _gen_params():
    vmem_cap = 64 << 20  # conservative default = v7x per-TC VMEM
    try:
        info = pltpu.get_tpu_info()
        vmem_cap = int(getattr(info, "vmem_capacity_bytes", vmem_cap))
    except Exception:
        pass
    if vmem_cap >= (100 << 20):
        # v5e / v6e: 128 MiB VMEM -> bigger tiles, deeper weight buffering
        return {"weight_budget": 48 << 20, "tn_max": 2048,
                "vmem_limit_cap": 100 << 20, "weight_buffers": 3}
    # v7x: 64 MiB VMEM -> stay well under physical capacity
    return {"weight_budget": 24 << 20, "tn_max": 2048,
            "vmem_limit_cap": 48 << 20, "weight_buffers": 2}


# ----------------------------------------------------------------------------
# Kernel 1: RMSNorm (hoisted: runs once per forward, not once per vocab tile)
# ----------------------------------------------------------------------------
def _rmsnorm_kernel(x_ref, g_ref, o_ref, *, eps):
    # x_ref: (B, H) f32, g_ref: (1, H) f32, o_ref: (B, H) bf16
    x = x_ref[...].astype(jnp.float32)
    var = jnp.mean(x * x, axis=-1, keepdims=True)
    xn = x * jax.lax.rsqrt(var + eps) * g_ref[...].astype(jnp.float32)
    o_ref[...] = xn.astype(o_ref.dtype)


def rmsnorm(x, gamma, *, eps):
    """x: (B, H) f32, gamma: (1, H) f32 -> (B, H) bf16 normalized activations."""
    B, H = x.shape
    return pl.pallas_call(
        functools.partial(_rmsnorm_kernel, eps=eps),
        out_shape=jax.ShapeDtypeStruct((B, H), jnp.bfloat16),
        grid_spec=pltpu.PrefetchScalarGridSpec(
            num_scalar_prefetch=0,
            grid=(1,),
            in_specs=[
                pl.BlockSpec((B, H), lambda i: (0, 0)),
                pl.BlockSpec((1, H), lambda i: (0, 0)),
            ],
            out_specs=pl.BlockSpec((B, H), lambda i: (0, 0)),
        ),
    )(x, gamma)


# ----------------------------------------------------------------------------
# Kernel 2: LM-head matmul, vocab-major int8 weights, tiled over padded vocab
# ----------------------------------------------------------------------------
def _lmhead_matmul_kernel(xn_ref, w_ref, s_ref, o_ref):
    # xn_ref: (B, H)  bf16 resident activations
    # w_ref : (TN, H) int8 vocab-major weight tile (one contiguous HBM slab/step)
    # s_ref : (1, TN) f32 per-vocab-column dequant scale
    # o_ref : (B, TN) f32 logits tile
    # int8 -> bf16 is exact (|w| <= 127); chained casts for robust Mosaic lowering.
    w = w_ref[...].astype(jnp.int32).astype(jnp.float32).astype(jnp.bfloat16)
    acc = lax.dot_general(
        xn_ref[...], w,
        dimension_numbers=(((1,), (1,)), ((), ())),   # NT matmul: contract on H
        preferred_element_type=jnp.float32)
    o_ref[...] = acc * s_ref[...]


def _choose_vocab_tile(v_total, hidden, *, w_itemsize, weight_budget, tn_max,
                       weight_buffers):
    """Largest 128-multiple tile of the vocab axis that divides v_total and fits the
    (multi-buffered) VMEM weight budget; prefers multiples of 256 (full MXU N passes)
    and an even grid-step count (balanced 2-TensorCore split on v7x)."""
    assert v_total % 128 == 0, "padded vocab must be a multiple of 128"
    nbuf = max(weight_buffers, 2)
    cap = (weight_budget // (nbuf * hidden * w_itemsize)) // 128 * 128
    cap = max(128, min(cap, tn_max, v_total))
    cands = [t for t in range(128, cap + 1, 128) if v_total % t == 0]
    if not cands:
        cands = [128]

    def score(t):
        steps = v_total // t
        return (
            steps % 2 == 0 and steps >= 2,  # even split across 2 TCs (megacore)
            t % 256 == 0,                   # 256-wide MXU N passes (v6e/v7x)
            t,                              # bigger tile amortizes per-step overhead
        )

    return max(cands, key=score)


def lmhead_matmul(xn, w_q, scales, *, tn, weight_buffers, vmem_limit_cap):
    """xn: (B, H) bf16, w_q: (V, H) int8 vocab-major, scales: (1, V) f32
       -> (B, V) f32 logits."""
    B, H = xn.shape
    V, H2 = w_q.shape
    assert H == H2 and V % tn == 0 and scales.shape == (1, V)
    steps = V // tn

    w_index = lambda j: (j, 0)
    use_deep = (weight_buffers > 2) and (steps >= 4)
    if use_deep:
        # Third in-flight weight tile hides DMA issue gaps (only on 128 MiB VMEM chips).
        w_spec = pl.BlockSpec((tn, H), w_index, pipeline_mode=pl.Buffered(weight_buffers))
    else:
        w_spec = pl.BlockSpec((tn, H), w_index)
    nbuf = weight_buffers if use_deep else 2

    # VMEM budget: multi-buffered weight tiles + scale tiles + resident xn + output.
    vmem_bytes = (
        nbuf * tn * H * w_q.dtype.itemsize
        + nbuf * tn * 4
        + 2 * B * H * xn.dtype.itemsize
        + 2 * B * tn * 4
        + (4 << 20)                      # Mosaic internal scratch slack
    )
    vmem_limit = int(min(max(vmem_bytes, 16 << 20), vmem_limit_cap))

    cost = pl.CostEstimate(
        flops=2 * B * H * V,
        bytes_accessed=(V * H * w_q.dtype.itemsize + V * 4
                        + B * H * xn.dtype.itemsize + B * V * 4),
        transcendentals=0,
    )

    return pl.pallas_call(
        _lmhead_matmul_kernel,
        out_shape=jax.ShapeDtypeStruct((B, V), jnp.float32),
        grid_spec=pltpu.PrefetchScalarGridSpec(
            num_scalar_prefetch=0,
            grid=(steps,),
            in_specs=[
                pl.BlockSpec((B, H), lambda j: (0, 0)),   # resident bf16 activations
                w_spec,                                   # contiguous (tn, H) int8 slab
                pl.BlockSpec((1, tn), lambda j: (0, j)),  # per-column dequant scale
            ],
            out_specs=pl.BlockSpec((B, tn), lambda j: (0, j)),
        ),
        compiler_params=pltpu.CompilerParams(
            dimension_semantics=("parallel",),
            vmem_limit_bytes=vmem_limit,
        ),
        cost_estimate=cost,
    )(xn, w_q, scales)


# ----------------------------------------------------------------------------
# Model wrapper (plain-JAX glue mirroring TtLlamaModel_optimized)
# ----------------------------------------------------------------------------
class LlamaModelOptimizedPallas:
    def __init__(self, *, num_devices, dim, n_heads, n_kv_heads, vocab_size,
                 padded_vocab, max_seq_len, norm_eps, key):
        assert padded_vocab % num_devices == 0
        self.num_devices = num_devices
        self.hidden_size = dim
        self.n_heads = n_heads
        self.head_dim = dim // n_heads
        self.vocab_size = vocab_size
        self.padded_vocab = padded_vocab
        self.vocab_per_device = padded_vocab // num_devices
        self.max_seq_len = max_seq_len
        self.norm_eps = norm_eps
        self.gen = _gen_params()

        k_emb, k_norm, k_head = jax.random.split(key, 3)
        # tok_embeddings.weight : (vocab, hidden)
        self.tok_embeddings = jax.random.normal(k_emb, (vocab_size, dim), jnp.float32) * 0.02
        # norm.weight : (hidden,)  (kept in f32; applied in the norm kernel)
        self.norm_weight = 1.0 + 0.01 * jax.random.normal(k_norm, (dim,), jnp.float32)

        # output.weight : (vocab, hidden). Stored VOCAB-MAJOR (padded_vocab, hidden)
        # so every streamed (tn, H) tile is one fully contiguous HBM slab, zero-padded
        # rows for the padded vocab, and quantized to int8 with a per-vocab-row f32
        # scale (Pallas analog of the reference's BFP8-compressed lm_head in DRAM).
        out_w = jax.random.normal(k_head, (vocab_size, dim), jnp.float32) * 0.02
        w_vh = jnp.zeros((padded_vocab, dim), jnp.float32).at[:vocab_size].set(out_w)
        absmax = jnp.max(jnp.abs(w_vh), axis=1, keepdims=True)          # (V, 1)
        scale = absmax / 127.0
        safe = jnp.where(scale > 0, scale, 1.0)
        self.lm_head_q = jnp.clip(jnp.round(w_vh / safe), -127, 127).astype(jnp.int8)
        self.lm_head_scale = scale.reshape(1, padded_vocab)             # (1, V) f32
        # TODO(synk): on v7x, feed fp8(e4m3) weights straight to the MXU (no VPU
        # dequant) instead of the generation-agnostic int8->bf16 in-kernel dequant.

    # --- prepare_inputs (decode mode): embed + fracture hidden dim ----------
    def prepare_inputs(self, inp_ids, start_pos):
        # inp_ids: (batch, seq=1) int32
        x = jnp.take(self.tok_embeddings, inp_ids, axis=0)          # (batch, 1, hidden)
        batch, seq_len, _ = x.shape
        assert seq_len == 1, "Only supporting decode mode"
        x = jnp.transpose(x, (1, 0, 2))[:, None, :, :]              # (seq, 1, batch, hidden)
        hd = self.hidden_size // self.num_devices
        xs = [x[..., i * hd:(i + 1) * hd] for i in range(self.num_devices)]
        # TODO(synk): rot_mats / attn_masks feed the (unavailable) TtLlamaDecoder_optimized
        # layers; they are unused by the model-level math implemented here.
        rot_mats = [jnp.eye(self.head_dim, dtype=jnp.float32)[None, None]
                    for _ in range(self.num_devices)]
        attn_masks = [None] * self.num_devices
        return xs, start_pos, rot_mats, attn_masks

    # --- forward -------------------------------------------------------------
    def forward(self, xs, rot_mats, start_pos, attn_masks):
        # TODO(synk): decoder layers (TtLlamaDecoder_optimized) source not provided;
        # treated as identity for this model-level kernel.

        # all_gather along hidden dim (dim=3): full hidden state on every "device".
        x_full = jnp.concatenate(xs, axis=-1)                        # (1, 1, batch, hidden)
        seq, _, batch, hidden = x_full.shape
        x2d = x_full.reshape(batch, hidden).astype(jnp.float32)      # (batch, hidden)

        # Pad batch to 16: bf16 vregs pack 16 sublanes -> fully packed LHS tiles.
        b_pad = (-batch) % 16
        if b_pad:
            x2d = jnp.pad(x2d, ((0, b_pad), (0, 0)))

        gamma = self.norm_weight.reshape(1, hidden)
        xn = rmsnorm(x2d, gamma, eps=self.norm_eps)                  # bf16, computed ONCE

        # One fused grid over the full padded vocab (all "device" chunks together);
        # per-device outputs are slices of this single lane-dense result.
        tn = _choose_vocab_tile(
            self.padded_vocab, hidden,
            w_itemsize=self.lm_head_q.dtype.itemsize,
            weight_budget=self.gen["weight_budget"],
            tn_max=self.gen["tn_max"],
            weight_buffers=self.gen["weight_buffers"])
        logits = lmhead_matmul(
            xn, self.lm_head_q, self.lm_head_scale, tn=tn,
            weight_buffers=self.gen["weight_buffers"],
            vmem_limit_cap=self.gen["vmem_limit_cap"])               # (B_pad, V) f32
        if b_pad:
            logits = logits[:batch]

        # NOTE: padded vocab columns (>= vocab_size) carry logit 0.0, mirroring the
        # TT reference which also leaves zero-padded lm_head columns in place.
        vd = self.vocab_per_device
        return [logits[:, i * vd:(i + 1) * vd].reshape(seq, 1, batch, vd)
                for i in range(self.num_devices)]


# ----------------------------------------------------------------------------
# Pure-JAX reference for sanity checking (same int8 weights / bf16 activations)
# ----------------------------------------------------------------------------
def _reference(model, xs):
    x = jnp.concatenate(xs, axis=-1).reshape(xs[0].shape[2], -1).astype(jnp.float32)
    var = jnp.mean(x * x, axis=-1, keepdims=True)
    xn = x * jax.lax.rsqrt(var + model.norm_eps) * model.norm_weight[None, :]
    xn = xn.astype(jnp.bfloat16).astype(jnp.float32)
    w = model.lm_head_q.astype(jnp.float32)                          # (V, H)
    full = (xn @ w.T) * model.lm_head_scale                          # (B, V)
    vd = model.vocab_per_device
    return [full[:, i * vd:(i + 1) * vd] for i in range(model.num_devices)]


if __name__ == "__main__":
    key = jax.random.PRNGKey(0)
    NUM_DEVICES = 2
    DIM = 32            # hidden size
    N_HEADS = 4
    N_KV_HEADS = 2
    VOCAB = 250
    PADDED_VOCAB = 512  # -> 256 per "device"
    MAX_SEQ = 16
    BATCH = 8
    EPS = 1e-5

    model = LlamaModelOptimizedPallas(
        num_devices=NUM_DEVICES, dim=DIM, n_heads=N_HEADS, n_kv_heads=N_KV_HEADS,
        vocab_size=VOCAB, padded_vocab=PADDED_VOCAB, max_seq_len=MAX_SEQ,
        norm_eps=EPS, key=key,
    )

    inp_ids = jax.random.randint(jax.random.PRNGKey(1), (BATCH, 1), 0, VOCAB, dtype=jnp.int32)
    start_pos = 7

    xs, start_pos, rot_mats, attn_masks = model.prepare_inputs(inp_ids, start_pos)
    out = model.forward(xs, rot_mats, start_pos, attn_masks)
    out = [jax.block_until_ready(o) for o in out]

    # sanity check vs pure-JAX reference (same quantized weights on both sides)
    ref = _reference(model, xs)
    for o, r in zip(out, ref):
        assert o.shape == (1, 1, BATCH, PADDED_VOCAB // NUM_DEVICES)
        assert jnp.allclose(o.reshape(BATCH, -1), r, atol=5e-3, rtol=5e-3)

    print("KERNEL_OK")
</pallas_src>

<mosaic_0001>
module attributes {stable_mosaic.version = 11 : i64} {
  func.func @_rmsnorm_kernel(%arg0: i32, %arg1: memref<16x32xf32, #tpu.memory_space<vmem>>, %arg2: memref<1x32xf32, #tpu.memory_space<vmem>>, %arg3: memref<16x32xbf16, #tpu.memory_space<vmem>>) attributes {dimension_semantics = [#tpu.dimension_semantics<arbitrary>], iteration_bounds = array<i64: 1>, scalar_prefetch = 0 : i64, scratch_operands = 0 : i64, tpu.core_type = #tpu.core_type<tc>, window_params = [{pipeline_mode = #tpu.pipeline_mode<synchronous>, transform_indices = @transform_0, window_bounds = array<i64: 16, 32>}, {pipeline_mode = #tpu.pipeline_mode<synchronous>, transform_indices = @transform_1, window_bounds = array<i64: 1, 32>}, {pipeline_mode = #tpu.pipeline_mode<synchronous>, transform_indices = @transform_2, window_bounds = array<i64: 16, 32>}]} {
    %c0 = arith.constant 0 : index
    %c0_0 = arith.constant 0 : index
    %0 = vector.load %arg1[%c0, %c0_0] : memref<16x32xf32, #tpu.memory_space<vmem>>, vector<16x32xf32>
    %1 = arith.mulf %0, %0 : vector<16x32xf32>
    %cst = arith.constant dense<0.000000e+00> : vector<16xf32>
    %2 = vector.multi_reduction <add>, %1, %cst [1] : vector<16x32xf32> to vector<16xf32>
    %3 = vector.shape_cast %2 : vector<16xf32> to vector<16x1xf32>
    %cst_1 = arith.constant 3.200000e+01 : f32
    %4 = vector.broadcast %cst_1 : f32 to vector<16x1xf32>
    %5 = arith.divf %3, %4 : vector<16x1xf32>
    %cst_2 = arith.constant 9.99999974E-6 : f32
    %6 = vector.broadcast %cst_2 : f32 to vector<16x1xf32>
    %7 = arith.addf %5, %6 : vector<16x1xf32>
    %8 = math.rsqrt %7 : vector<16x1xf32>
    %9 = vector.broadcast %8 : vector<16x1xf32> to vector<16x32xf32>
    %10 = arith.mulf %0, %9 : vector<16x32xf32>
    %c0_3 = arith.constant 0 : index
    %c0_4 = arith.constant 0 : index
    %11 = vector.load %arg2[%c0_3, %c0_4] : memref<1x32xf32, #tpu.memory_space<vmem>>, vector<1x32xf32>
    %12 = vector.broadcast %11 : vector<1x32xf32> to vector<16x32xf32>
    %13 = arith.mulf %10, %12 : vector<16x32xf32>
    %14 = arith.truncf %13 : vector<16x32xf32> to vector<16x32xbf16>
    %c0_5 = arith.constant 0 : index
    %c0_6 = arith.constant 0 : index
    %15 = vector.load %arg3[%c0_5, %c0_6] : memref<16x32xbf16, #tpu.memory_space<vmem>>, vector<16x32xbf16>
    tpu.vector_store %arg3[%c0_5, %c0_6], %14 {strides = array<i32>} : memref<16x32xbf16, #tpu.memory_space<vmem>>, vector<16x32xbf16>,
    return
  }
  func.func @transform_0(%arg0: i32) -> (i32, i32) {
    %c0_i32 = arith.constant 0 : i32
    %c0_i32_0 = arith.constant 0 : i32
    %c0_i32_1 = arith.constant 0 : i32
    return %c0_i32, %c0_i32_0 : i32, i32
  }
  func.func @transform_1(%arg0: i32) -> (i32, i32) {
    %c0_i32 = arith.constant 0 : i32
    %c0_i32_0 = arith.constant 0 : i32
    %c0_i32_1 = arith.constant 0 : i32
    return %c0_i32, %c0_i32_0 : i32, i32
  }
  func.func @transform_2(%arg0: i32) -> (i32, i32) {
    %c0_i32 = arith.constant 0 : i32
    %c0_i32_0 = arith.constant 0 : i32
    %c0_i32_1 = arith.constant 0 : i32
    return %c0_i32, %c0_i32_0 : i32, i32
  }
}

</mosaic_0001>

<llo_original>
// kernel: tpu_custom_call.1
$region0: #{tpu_custom_call.1}
  #allocation0 [shape = 'u32[]', space=smem, size = 0x4, offset = 0x4, fixed_abs, tag = 'smem constant byte address 0x4 - core index']
  #allocation1 [shape = 'u32[144,128]{1,0:T(1,128)}', space=vmem, size = 0x12000, scoped, tag = 'internal scratch']
  %s0 = inlined_call_operand.hbm [shape: f32[16,32], index: 0, kind: input, shape index: {}]
  %s1 = inlined_call_operand.vmem [shape: f32[1,32], index: 1, kind: input, shape index: {}]
  %s2 = inlined_call_operand.hbm [shape: bf16[16,32], index: 2, kind: output, shape index: {}]
  %s3 = sld [smem:[#allocation0]]
  $region22: #{tpu_custom_call.1} parent=0
    _
  %s5 = ssub.s32 1, %s3
  %s6 = scalar_select 0, %s5, %s3
  $region1: #{tpu_custom_call.1} parent=0
    #allocation2 [shape = 'u8[8192]{0}', space=vmem, size = 0x2000, scoped, tag = 'input window, operand 0, single buffered']
    #allocation3 [shape = 's32[1]{0}', space=sflag, size = 0x4, scoped, tag = 'scoped memory for tpu_custom_call.1']
    #allocation4 [shape = 's32[1]{0}', space=sflag, size = 0x4, scoped, tag = 'scoped memory for tpu_custom_call.1']
    #allocation5 [shape = 'u8[4096]{0}', space=vmem, size = 0x1000, scoped, tag = 'output window, operand 0, single buffered']
    %7 = vsyncpa [#allocation3], 0
    %8 = vsyncpa [#allocation4], 0
    // Predicated region
    $region2: #{tpu_custom_call.1} parent=1 // pred_check
      _
    $region3: #{tpu_custom_call.1} parent=1 // pred_check_branch
      %10 = sbr.rel (0) target = $region5
    $region4: #{tpu_custom_call.1} parent=1 // pred_region
      %s12 = ssub.s32 256, 256
      %13 = vsyncadd [#allocation3], %s12
      %s14 = sshll.u32 [#allocation2], 4
      %s15 = int_to_ptr.vmem [resolvable:$true] %s14
      %20 = dma.hbm_to_vmem [thread:$0]  %s0, 256, %s15, [#allocation3], 128, 128, 8
    $region5: #{tpu_custom_call.1} parent=1 // pred_fallthru
      _
    // Predicated region
    $region6: #{tpu_custom_call.1} parent=1 // pred_check
      _
    $region7: #{tpu_custom_call.1} parent=1 // pred_check_branch
      %22 = sbr.rel (0) target = $region9
    $region8: #{tpu_custom_call.1} parent=1 // pred_region
      _
    $region9: #{tpu_custom_call.1} parent=1 // pred_fallthru
      _
    // Predicated region
    $region10: #{tpu_custom_call.1} parent=1 // pred_check
      _
    $region11: #{tpu_custom_call.1} parent=1 // pred_check_branch
      %24 = sbr.rel (0) target = $region13
    $region12: #{tpu_custom_call.1} parent=1 // pred_region
      %25 = dma.done [#allocation3], 256
    $region13: #{tpu_custom_call.1} parent=1 // pred_fallthru
      _
    %v26 = vld [vmem:[#allocation2] sm:$0xff]
    %v27 = vld [vmem:[#allocation2 + $0x8] sm:$0xff]
    %v28 = vmul.f32 %v26, %v26
    %v29 = vmul.f32 %v27, %v27
    %vm30 = vcmask 261120
    %v31 = vsel %vm30, %v28, 0.0
    %32 = vadd.xlane.f32.xlu0 %v31
    %v33 = vpop.xlane.xlu0 %32
    %v34 = vsel %vm30, %v29, 0.0
    %35 = vadd.xlane.f32.xlu0 %v34
    %v36 = vpop.xlane.xlu0 %35
    %v37 = vrcp.pop 32.0
    %v38 = vmul.f32 %v33, %v37
    %v39 = vmul.f32 %v36, %v37
    %v40 = vadd.f32 %v38, 1e-05
    %v41 = vadd.f32 %v39, 1e-05
    %v42 = vrsqrt.pop %v40
    %v43 = vrsqrt.pop %v41
    %v44 = vmul.f32 %v26, %v42
    %v45 = vmul.f32 %v27, %v43
    %v46 = vld [vmem:[%s1] sm:$0x1]
    %v48 = vlaneseq
    %v49 = vshrl.u32 %v48, 7
    %v50 = vsub.s32 0, %v49
    %v51 = vrot.slane %v46, %v50
    %v53 = vmul.f32 %v44, %v51
    %v54 = vmul.f32 %v45, %v51
    %v55 = vpack.c.bf16 %v54, %v53
    %v57 = vunpack.c.l.b16 %v55
    %v58 = vunpack.c.h.b16 %v55
    %v59 = vpack.c.b16 %v57, %v57
    %v60 = vpack.c.b16 %v58, %v58
    %vm63 = vcmask 257024
    %64 = vst.msk [vmem:[#allocation5] sm:$0xf] %vm63, %v59
    %65 = vst.msk [vmem:[#allocation5 + $0x4] sm:$0xf] %vm63, %v60
    // Predicated region
    $region14: #{tpu_custom_call.1} parent=1 // pred_check
      _
    $region15: #{tpu_custom_call.1} parent=1 // pred_check_branch
      %67 = sbr.rel (0) target = $region17
    $region16: #{tpu_custom_call.1} parent=1 // pred_region
      %s69 = ssub.s32 128, 128
      %70 = vsyncadd [#allocation4], %s69
      %s71 = sshll.u32 [#allocation5], 4
      %s72 = int_to_ptr.vmem [resolvable:$true] %s71
      %77 = dma.vmem_to_hbm [thread:$0]  %s72, 128, %s2, [#allocation4], 64, 64, 4
    $region17: #{tpu_custom_call.1} parent=1 // pred_fallthru
      _
    // Predicated region
    $region18: #{tpu_custom_call.1} parent=1 // pred_check
      _
    $region19: #{tpu_custom_call.1} parent=1 // pred_check_branch
      %79 = sbr.rel (0) target = $region21
    $region20: #{tpu_custom_call.1} parent=1 // pred_region
      %80 = dma.done [#allocation4], 128
    $region21: #{tpu_custom_call.1} parent=1 // pred_fallthru
      _
    %81 = vsyncpa [#allocation3], 1
    %82 = vsyncpa [#allocation4], 1

</llo_original>
